<compile_context>
chip_gen: v5e
topology: v5e:2x2
jax: 0.10.0
libtpu: 0.0.40
codegen_flags: <defaults>
</compile_context>

<pallas_src>
import functools

import jax
import jax.numpy as jnp
from jax.experimental import pallas as pl
from jax.experimental.pallas import tpu as pltpu


def _smear_kernel(dist_ref, offset_ref, out_ref, *, coeff, exp_dtype):
    # Same body for both layouts; broadcasting does the work.
    #   row path:        dist (TM, 1), offset (1, R)  -> out (TM, R)
    #   lane-dense path: dist (1, TN), offset (R, 1)  -> out (R, TN)
    d = dist_ref[...].astype(jnp.float32) - offset_ref[...]
    arg = (coeff * d * d).astype(exp_dtype)
    out_ref[...] = jnp.exp(arg).astype(out_ref.dtype)


def _auto_tile(n, max_tile, min_tile=512):
    # Aim for >= 8 grid steps when N allows (v7x megacore sharding + pipeline
    # depth), never below min_tile (per-step overhead ~0.35 us), never above
    # max_tile, always a multiple of 128 (satisfies both lane/sublane needs).
    t = -(-n // 8)              # ceil(n / 8)
    t = -(-t // 128) * 128      # round up to a lane multiple
    return max(min_tile, min(max_tile, t))


def gaussian_smearing(dist, *, start=0.0, stop=5.0, resolution=50, width=0.05,
                      tile=None, lane_dense=False,
                      out_dtype=jnp.float32, exp_dtype=jnp.float32):
    """Gaussian smearing of distances.

    dist: (N,) float array.
    Returns (N, resolution) by default (PyTorch layout), or (resolution, N)
    if lane_dense=True (recommended when the consumer can take the transposed
    layout: distances sit on the 128-lane axis -> unmasked full-width stores).
    """
    dist = jnp.asarray(dist, dtype=jnp.float32)
    n = dist.shape[0]

    coeff = float(-0.5 / ((stop - start) * width) ** 2)
    offset = jnp.linspace(start, stop, resolution, dtype=jnp.float32)

    if n == 0:
        shape = (resolution, 0) if lane_dense else (0, resolution)
        return jnp.zeros(shape, dtype=out_dtype)

    if tile is None:
        tile = _auto_tile(n, max_tile=8192 if lane_dense else 2048)

    out_itemsize = jnp.dtype(out_dtype).itemsize
    cost = pl.CostEstimate(
        flops=3 * n * resolution,
        transcendentals=n * resolution,
        bytes_accessed=out_itemsize * n * resolution + 4 * (n + resolution),
    )
    cparams = pltpu.CompilerParams(dimension_semantics=("parallel",))
    kernel = functools.partial(_smear_kernel, coeff=coeff, exp_dtype=exp_dtype)
    num_tiles = pl.cdiv(n, tile)  # Pallas masks the partial last block.

    if lane_dense:
        assert tile % 128 == 0, "lane-dense tile must be a multiple of 128"
        return pl.pallas_call(
            kernel,
            out_shape=jax.ShapeDtypeStruct((resolution, n), out_dtype),
            grid_spec=pltpu.PrefetchScalarGridSpec(
                num_scalar_prefetch=0,
                grid=(num_tiles,),
                in_specs=[
                    pl.BlockSpec((1, tile), lambda i: (0, i)),
                    pl.BlockSpec((resolution, 1), lambda i: (0, 0)),
                ],
                out_specs=pl.BlockSpec((resolution, tile), lambda i: (0, i)),
            ),
            compiler_params=cparams,
            cost_estimate=cost,
        )(dist.reshape(1, n), offset.reshape(resolution, 1))

    # Drop-in PyTorch (N, R) layout.  Keep tile modest here: the (tile, 1)
    # dist column pads 128x across lanes in VMEM.
    assert tile % 8 == 0, "row-layout tile must be a multiple of 8"
    return pl.pallas_call(
        kernel,
        out_shape=jax.ShapeDtypeStruct((n, resolution), out_dtype),
        grid_spec=pltpu.PrefetchScalarGridSpec(
            num_scalar_prefetch=0,
            grid=(num_tiles,),
            in_specs=[
                pl.BlockSpec((tile, 1), lambda i: (i, 0)),
                pl.BlockSpec((1, resolution), lambda i: (0, 0)),
            ],
            out_specs=pl.BlockSpec((tile, resolution), lambda i: (i, 0)),
        ),
        compiler_params=cparams,
        cost_estimate=cost,
    )(dist.reshape(n, 1), offset.reshape(1, resolution))


def _reference(dist, *, start=0.0, stop=5.0, resolution=50, width=0.05):
    offset = jnp.linspace(start, stop, resolution, dtype=jnp.float32)
    coeff = -0.5 / ((stop - start) * width) ** 2
    d = dist[:, None] - offset[None, :]
    return jnp.exp(coeff * d * d)


if __name__ == "__main__":
    key = jax.random.PRNGKey(0)
    n = 300  # deliberately not a multiple of 8 or 128 (exercises masked tail)
    dist = jax.random.uniform(key, (n,), dtype=jnp.float32,
                              minval=0.0, maxval=5.0)
    ref = _reference(dist)

    # 1) Default: PyTorch layout (N, R).
    out = jax.block_until_ready(gaussian_smearing(dist))
    assert out.shape == (n, 50), out.shape
    assert jnp.allclose(out, ref, atol=1e-5, rtol=1e-5), "mismatch (default)"

    # 2) Small tile -> multi-step grid with a masked partial last block.
    out_small = jax.block_until_ready(gaussian_smearing(dist, tile=128))
    assert jnp.allclose(out_small, ref, atol=1e-5, rtol=1e-5), "mismatch (tile=128)"

    # 3) Lane-dense (R, N) variant: unmasked full-width stores.
    out_t = jax.block_until_ready(gaussian_smearing(dist, lane_dense=True))
    assert out_t.shape == (50, n), out_t.shape
    assert jnp.allclose(out_t.T, ref, atol=1e-5, rtol=1e-5), "mismatch (lane_dense)"

    # 4) Lane-dense + bf16 output + bf16 exp (v6e/v7x EUP path).
    out_bf = jax.block_until_ready(
        gaussian_smearing(dist, lane_dense=True,
                          out_dtype=jnp.bfloat16, exp_dtype=jnp.bfloat16))
    assert out_bf.dtype == jnp.bfloat16
    assert jnp.allclose(out_bf.T.astype(jnp.float32), ref, atol=2e-2, rtol=0), \
        "mismatch (lane_dense bf16)"

    print("KERNEL_OK")
</pallas_src>

<mosaic_0001>
module attributes {stable_mosaic.version = 11 : i64} {
  func.func @_smear_kernel(%arg0: i32, %arg1: memref<512x1xf32, #tpu.memory_space<vmem>>, %arg2: memref<1x50xf32, #tpu.memory_space<vmem>>, %arg3: memref<512x50xf32, #tpu.memory_space<vmem>>) attributes {dimension_semantics = [#tpu.dimension_semantics<parallel>], iteration_bounds = array<i64: 1>, scalar_prefetch = 0 : i64, scratch_operands = 0 : i64, tpu.core_type = #tpu.core_type<tc>, window_params = [{transform_indices = @transform_0, window_bounds = array<i64: 512, 1>}, {pipeline_mode = #tpu.pipeline_mode<synchronous>, transform_indices = @transform_1, window_bounds = array<i64: 1, 50>}, {transform_indices = @transform_2, window_bounds = array<i64: 512, 50>}]} {
    %c0 = arith.constant 0 : index
    %c0_0 = arith.constant 0 : index
    %0 = vector.load %arg1[%c0, %c0_0] : memref<512x1xf32, #tpu.memory_space<vmem>>, vector<512x1xf32>
    %c0_1 = arith.constant 0 : index
    %c0_2 = arith.constant 0 : index
    %1 = vector.load %arg2[%c0_1, %c0_2] : memref<1x50xf32, #tpu.memory_space<vmem>>, vector<1x50xf32>
    %2 = vector.broadcast %0 : vector<512x1xf32> to vector<512x50xf32>
    %3 = vector.broadcast %1 : vector<1x50xf32> to vector<512x50xf32>
    %4 = arith.subf %2, %3 : vector<512x50xf32>
    %cst = arith.constant -8.000000e+00 : f32
    %5 = vector.broadcast %cst : f32 to vector<512x50xf32>
    %6 = arith.mulf %5, %4 : vector<512x50xf32>
    %7 = arith.mulf %6, %4 : vector<512x50xf32>
    %8 = math.exp %7 : vector<512x50xf32>
    %c0_3 = arith.constant 0 : index
    %c0_4 = arith.constant 0 : index
    %9 = vector.load %arg3[%c0_3, %c0_4] : memref<512x50xf32, #tpu.memory_space<vmem>>, vector<512x50xf32>
    tpu.vector_store %arg3[%c0_3, %c0_4], %8 {strides = array<i32>} : memref<512x50xf32, #tpu.memory_space<vmem>>, vector<512x50xf32>,
    return
  }
  func.func @transform_0(%arg0: i32) -> (i32, i32) {
    %c0_i32 = arith.constant 0 : i32
    %c0_i32_0 = arith.constant 0 : i32
    return %arg0, %c0_i32 : i32, i32
  }
  func.func @transform_1(%arg0: i32) -> (i32, i32) {
    %c0_i32 = arith.constant 0 : i32
    %c0_i32_0 = arith.constant 0 : i32
    %c0_i32_1 = arith.constant 0 : i32
    return %c0_i32, %c0_i32_0 : i32, i32
  }
  func.func @transform_2(%arg0: i32) -> (i32, i32) {
    %c0_i32 = arith.constant 0 : i32
    %c0_i32_0 = arith.constant 0 : i32
    return %arg0, %c0_i32 : i32, i32
  }
}

</mosaic_0001>

<llo_original>
// kernel: tpu_custom_call.1
$region0: #{tpu_custom_call.1}
  #allocation0 [shape = 'u32[]', space=smem, size = 0x4, offset = 0x4, fixed_abs, tag = 'smem constant byte address 0x4 - core index']
  #allocation1 [shape = 'u32[72,128]{1,0:T(1,128)}', space=vmem, size = 0x9000, scoped, tag = 'internal scratch']
  %s0 = inlined_call_operand.vmem [shape: f32[300,1], index: 0, kind: input, shape index: {}]
  %s1 = inlined_call_operand.vmem [shape: f32[1,50], index: 1, kind: input, shape index: {}]
  %s2 = inlined_call_operand.vmem [shape: f32[300,50], index: 2, kind: output, shape index: {}]
  %s3 = sld [smem:[#allocation0]]
  $region52: #{tpu_custom_call.1} parent=0
    _
  %s5 = ssub.s32 1, %s3
  %s6 = scalar_select 0, %s5, %s3
  $region1: #{tpu_custom_call.1} parent=0
    #allocation2 [shape = 'u8[262144]{0}', space=vmem, size = 0x40000, scoped, tag = 'output window, operand 0, single buffered']
    // Predicated region
    $region2: #{tpu_custom_call.1} parent=1 // pred_check
      _
    $region3: #{tpu_custom_call.1} parent=1 // pred_check_branch
      %8 = sbr.rel (0) target = $region5
    $region4: #{tpu_custom_call.1} parent=1 // pred_region
      _
    $region5: #{tpu_custom_call.1} parent=1 // pred_fallthru
      _
    // Predicated region
    $region6: #{tpu_custom_call.1} parent=1 // pred_check
      _
    $region7: #{tpu_custom_call.1} parent=1 // pred_check_branch
      %10 = sbr.rel (0) target = $region9
    $region8: #{tpu_custom_call.1} parent=1 // pred_region
      _
    $region9: #{tpu_custom_call.1} parent=1 // pred_fallthru
      _
    %v11 = vld [vmem:[%s0] sm:$0xff]
    %v12 = vld [vmem:[%s0 + $0x8] sm:$0xff]
    %v13 = vld [vmem:[%s0 + $0x10] sm:$0xff]
    %v14 = vld [vmem:[%s0 + $0x18] sm:$0xff]
    %v15 = vld [vmem:[%s0 + $0x20] sm:$0xff]
    %v16 = vld [vmem:[%s0 + $0x28] sm:$0xff]
    %v17 = vld [vmem:[%s0 + $0x30] sm:$0xff]
    %v18 = vld [vmem:[%s0 + $0x38] sm:$0xff]
    %v19 = vld [vmem:[%s0 + $0x40] sm:$0xff]
    %v20 = vld [vmem:[%s0 + $0x48] sm:$0xff]
    %v21 = vld [vmem:[%s0 + $0x50] sm:$0xff]
    %v22 = vld [vmem:[%s0 + $0x58] sm:$0xff]
    %v23 = vld [vmem:[%s0 + $0x60] sm:$0xff]
    %v24 = vld [vmem:[%s0 + $0x68] sm:$0xff]
    %v25 = vld [vmem:[%s0 + $0x70] sm:$0xff]
    %v26 = vld [vmem:[%s0 + $0x78] sm:$0xff]
    %v27 = vld [vmem:[%s0 + $0x80] sm:$0xff]
    %v28 = vld [vmem:[%s0 + $0x88] sm:$0xff]
    %v29 = vld [vmem:[%s0 + $0x90] sm:$0xff]
    %v30 = vld [vmem:[%s0 + $0x98] sm:$0xff]
    %v31 = vld [vmem:[%s0 + $0xa0] sm:$0xff]
    %v32 = vld [vmem:[%s0 + $0xa8] sm:$0xff]
    %v33 = vld [vmem:[%s0 + $0xb0] sm:$0xff]
    %v34 = vld [vmem:[%s0 + $0xb8] sm:$0xff]
    %v35 = vld [vmem:[%s0 + $0xc0] sm:$0xff]
    %v36 = vld [vmem:[%s0 + $0xc8] sm:$0xff]
    %v37 = vld [vmem:[%s0 + $0xd0] sm:$0xff]
    %v38 = vld [vmem:[%s0 + $0xd8] sm:$0xff]
    %v39 = vld [vmem:[%s0 + $0xe0] sm:$0xff]
    %v40 = vld [vmem:[%s0 + $0xe8] sm:$0xff]
    %v41 = vld [vmem:[%s0 + $0xf0] sm:$0xff]
    %v42 = vld [vmem:[%s0 + $0xf8] sm:$0xff]
    %v43 = vld [vmem:[%s0 + $0x100] sm:$0xff]
    %v44 = vld [vmem:[%s0 + $0x108] sm:$0xff]
    %v45 = vld [vmem:[%s0 + $0x110] sm:$0xff]
    %v46 = vld [vmem:[%s0 + $0x118] sm:$0xff]
    %v47 = vld [vmem:[%s0 + $0x120] sm:$0xff]
    %v48 = vld [vmem:[%s0 + $0x128] sm:$0xff]
    %v49 = vld [vmem:[%s0 + $0x130] sm:$0xff]
    %v50 = vld [vmem:[%s0 + $0x138] sm:$0xff]
    %v51 = vld [vmem:[%s0 + $0x140] sm:$0xff]
    %v52 = vld [vmem:[%s0 + $0x148] sm:$0xff]
    %v53 = vld [vmem:[%s0 + $0x150] sm:$0xff]
    %v54 = vld [vmem:[%s0 + $0x158] sm:$0xff]
    %v55 = vld [vmem:[%s0 + $0x160] sm:$0xff]
    %v56 = vld [vmem:[%s0 + $0x168] sm:$0xff]
    %v57 = vld [vmem:[%s0 + $0x170] sm:$0xff]
    %v58 = vld [vmem:[%s0 + $0x178] sm:$0xff]
    %v59 = vld [vmem:[%s0 + $0x180] sm:$0xff]
    %v60 = vld [vmem:[%s0 + $0x188] sm:$0xff]
    %v61 = vld [vmem:[%s0 + $0x190] sm:$0xff]
    %v62 = vld [vmem:[%s0 + $0x198] sm:$0xff]
    %v63 = vld [vmem:[%s0 + $0x1a0] sm:$0xff]
    %v64 = vld [vmem:[%s0 + $0x1a8] sm:$0xff]
    %v65 = vld [vmem:[%s0 + $0x1b0] sm:$0xff]
    %v66 = vld [vmem:[%s0 + $0x1b8] sm:$0xff]
    %v67 = vld [vmem:[%s0 + $0x1c0] sm:$0xff]
    %v68 = vld [vmem:[%s0 + $0x1c8] sm:$0xff]
    %v69 = vld [vmem:[%s0 + $0x1d0] sm:$0xff]
    %v70 = vld [vmem:[%s0 + $0x1d8] sm:$0xff]
    %v71 = vld [vmem:[%s0 + $0x1e0] sm:$0xff]
    %v72 = vld [vmem:[%s0 + $0x1e8] sm:$0xff]
    %v73 = vld [vmem:[%s0 + $0x1f0] sm:$0xff]
    %v74 = vld [vmem:[%s0 + $0x1f8] sm:$0xff]
    %v75 = vld [vmem:[%s1] sm:$0x1]
    %77 = vset.pattern.permute.xlu0 0
    %78 = vperm.xlu0 %77, %v11
    %v79 = vpop.permute.xlu0 %78
    %82 = vset.pattern.permute.xlu0 0
    %83 = vperm.xlu0 %82, %v12
    %v84 = vpop.permute.xlu0 %83
    %87 = vset.pattern.permute.xlu0 0
    %88 = vperm.xlu0 %87, %v13
    %v89 = vpop.permute.xlu0 %88
    %92 = vset.pattern.permute.xlu0 0
    %93 = vperm.xlu0 %92, %v14
    %v94 = vpop.permute.xlu0 %93
    %97 = vset.pattern.permute.xlu0 0
    %98 = vperm.xlu0 %97, %v15
    %v99 = vpop.permute.xlu0 %98
    %102 = vset.pattern.permute.xlu0 0
    %103 = vperm.xlu0 %102, %v16
    %v104 = vpop.permute.xlu0 %103
    %107 = vset.pattern.permute.xlu0 0
    %108 = vperm.xlu0 %107, %v17
    %v109 = vpop.permute.xlu0 %108
    %112 = vset.pattern.permute.xlu0 0
    %113 = vperm.xlu0 %112, %v18
    %v114 = vpop.permute.xlu0 %113
    %117 = vset.pattern.permute.xlu0 0
    %118 = vperm.xlu0 %117, %v19
    %v119 = vpop.permute.xlu0 %118
    %122 = vset.pattern.permute.xlu0 0
    %123 = vperm.xlu0 %122, %v20
    %v124 = vpop.permute.xlu0 %123
    %127 = vset.pattern.permute.xlu0 0
    %128 = vperm.xlu0 %127, %v21
    %v129 = vpop.permute.xlu0 %128
    %132 = vset.pattern.permute.xlu0 0
    %133 = vperm.xlu0 %132, %v22
    %v134 = vpop.permute.xlu0 %133
    %137 = vset.pattern.permute.xlu0 0
    %138 = vperm.xlu0 %137, %v23
    %v139 = vpop.permute.xlu0 %138
    %142 = vset.pattern.permute.xlu0 0
    %143 = vperm.xlu0 %142, %v24
    %v144 = vpop.permute.xlu0 %143
    %147 = vset.pattern.permute.xlu0 0
    %148 = vperm.xlu0 %147, %v25
    %v149 = vpop.permute.xlu0 %148
    %152 = vset.pattern.permute.xlu0 0
    %153 = vperm.xlu0 %152, %v26
    %v154 = vpop.permute.xlu0 %153
    %157 = vset.pattern.permute.xlu0 0
    %158 = vperm.xlu0 %157, %v27
    %v159 = vpop.permute.xlu0 %158
    %162 = vset.pattern.permute.xlu0 0
    %163 = vperm.xlu0 %162, %v28
    %v164 = vpop.permute.xlu0 %163
    %167 = vset.pattern.permute.xlu0 0
    %168 = vperm.xlu0 %167, %v29
    %v169 = vpop.permute.xlu0 %168
    %172 = vset.pattern.permute.xlu0 0
    %173 = vperm.xlu0 %172, %v30
    %v174 = vpop.permute.xlu0 %173
    %177 = vset.pattern.permute.xlu0 0
    %178 = vperm.xlu0 %177, %v31
    %v179 = vpop.permute.xlu0 %178
    %182 = vset.pattern.permute.xlu0 0
    %183 = vperm.xlu0 %182, %v32
    %v184 = vpop.permute.xlu0 %183
    %187 = vset.pattern.permute.xlu0 0
    %188 = vperm.xlu0 %187, %v33
    %v189 = vpop.permute.xlu0 %188
    %192 = vset.pattern.permute.xlu0 0
    %193 = vperm.xlu0 %192, %v34
    %v194 = vpop.permute.xlu0 %193
    %197 = vset.pattern.permute.xlu0 0
    %198 = vperm.xlu0 %197, %v35
    %v199 = vpop.permute.xlu0 %198
    %202 = vset.pattern.permute.xlu0 0
    %203 = vperm.xlu0 %202, %v36
    %v204 = vpop.permute.xlu0 %203
    %207 = vset.pattern.permute.xlu0 0
    %208 = vperm.xlu0 %207, %v37
    %v209 = vpop.permute.xlu0 %208
    %212 = vset.pattern.permute.xlu0 0
    %213 = vperm.xlu0 %212, %v38
    %v214 = vpop.permute.xlu0 %213
    %217 = vset.pattern.permute.xlu0 0
    %218 = vperm.xlu0 %217, %v39
    %v219 = vpop.permute.xlu0 %218
    %222 = vset.pattern.permute.xlu0 0
    %223 = vperm.xlu0 %222, %v40
    %v224 = vpop.permute.xlu0 %223
    %227 = vset.pattern.permute.xlu0 0
    %228 = vperm.xlu0 %227, %v41
    %v229 = vpop.permute.xlu0 %228
    %232 = vset.pattern.permute.xlu0 0
    %233 = vperm.xlu0 %232, %v42
    %v234 = vpop.permute.xlu0 %233
    %237 = vset.pattern.permute.xlu0 0
    %238 = vperm.xlu0 %237, %v43
    %v239 = vpop.permute.xlu0 %238
    %242 = vset.pattern.permute.xlu0 0
    %243 = vperm.xlu0 %242, %v44
    %v244 = vpop.permute.xlu0 %243
    %247 = vset.pattern.permute.xlu0 0
    %248 = vperm.xlu0 %247, %v45
    %v249 = vpop.permute.xlu0 %248
    %252 = vset.pattern.permute.xlu0 0
    %253 = vperm.xlu0 %252, %v46
    %v254 = vpop.permute.xlu0 %253
    %257 = vset.pattern.permute.xlu0 0
    %258 = vperm.xlu0 %257, %v47
    %v259 = vpop.permute.xlu0 %258
    %262 = vset.pattern.permute.xlu0 0
    %263 = vperm.xlu0 %262, %v48
    %v264 = vpop.permute.xlu0 %263
    %267 = vset.pattern.permute.xlu0 0
    %268 = vperm.xlu0 %267, %v49
    %v269 = vpop.permute.xlu0 %268
    %272 = vset.pattern.permute.xlu0 0
    %273 = vperm.xlu0 %272, %v50
    %v274 = vpop.permute.xlu0 %273
    %277 = vset.pattern.permute.xlu0 0
    %278 = vperm.xlu0 %277, %v51
    %v279 = vpop.permute.xlu0 %278
    %282 = vset.pattern.permute.xlu0 0
    %283 = vperm.xlu0 %282, %v52
    %v284 = vpop.permute.xlu0 %283
    %287 = vset.pattern.permute.xlu0 0
    %288 = vperm.xlu0 %287, %v53
    %v289 = vpop.permute.xlu0 %288
    %292 = vset.pattern.permute.xlu0 0
    %293 = vperm.xlu0 %292, %v54
    %v294 = vpop.permute.xlu0 %293
    %297 = vset.pattern.permute.xlu0 0
    %298 = vperm.xlu0 %297, %v55
    %v299 = vpop.permute.xlu0 %298
    %302 = vset.pattern.permute.xlu0 0
    %303 = vperm.xlu0 %302, %v56
    %v304 = vpop.permute.xlu0 %303
    %307 = vset.pattern.permute.xlu0 0
    %308 = vperm.xlu0 %307, %v57
    %v309 = vpop.permute.xlu0 %308
    %312 = vset.pattern.permute.xlu0 0
    %313 = vperm.xlu0 %312, %v58
    %v314 = vpop.permute.xlu0 %313
    %317 = vset.pattern.permute.xlu0 0
    %318 = vperm.xlu0 %317, %v59
    %v319 = vpop.permute.xlu0 %318
    %322 = vset.pattern.permute.xlu0 0
    %323 = vperm.xlu0 %322, %v60
    %v324 = vpop.permute.xlu0 %323
    %327 = vset.pattern.permute.xlu0 0
    %328 = vperm.xlu0 %327, %v61
    %v329 = vpop.permute.xlu0 %328
    %332 = vset.pattern.permute.xlu0 0
    %333 = vperm.xlu0 %332, %v62
    %v334 = vpop.permute.xlu0 %333
    %337 = vset.pattern.permute.xlu0 0
    %338 = vperm.xlu0 %337, %v63
    %v339 = vpop.permute.xlu0 %338
    %342 = vset.pattern.permute.xlu0 0
    %343 = vperm.xlu0 %342, %v64
    %v344 = vpop.permute.xlu0 %343
    %347 = vset.pattern.permute.xlu0 0
    %348 = vperm.xlu0 %347, %v65
    %v349 = vpop.permute.xlu0 %348
    %352 = vset.pattern.permute.xlu0 0
    %353 = vperm.xlu0 %352, %v66
    %v354 = vpop.permute.xlu0 %353
    %357 = vset.pattern.permute.xlu0 0
    %358 = vperm.xlu0 %357, %v67
    %v359 = vpop.permute.xlu0 %358
    %362 = vset.pattern.permute.xlu0 0
    %363 = vperm.xlu0 %362, %v68
    %v364 = vpop.permute.xlu0 %363
    %367 = vset.pattern.permute.xlu0 0
    %368 = vperm.xlu0 %367, %v69
    %v369 = vpop.permute.xlu0 %368
    %372 = vset.pattern.permute.xlu0 0
    %373 = vperm.xlu0 %372, %v70
    %v374 = vpop.permute.xlu0 %373
    %377 = vset.pattern.permute.xlu0 0
    %378 = vperm.xlu0 %377, %v71
    %v379 = vpop.permute.xlu0 %378
    %382 = vset.pattern.permute.xlu0 0
    %383 = vperm.xlu0 %382, %v72
    %v384 = vpop.permute.xlu0 %383
    %387 = vset.pattern.permute.xlu0 0
    %388 = vperm.xlu0 %387, %v73
    %v389 = vpop.permute.xlu0 %388
    %392 = vset.pattern.permute.xlu0 0
    %393 = vperm.xlu0 %392, %v74
    %v394 = vpop.permute.xlu0 %393
    %v397 = vperm.slane %v75, 0
    %v399 = vsub.f32 %v79, %v397
    %v400 = vsub.f32 %v84, %v397
    %v401 = vsub.f32 %v89, %v397
    %v402 = vsub.f32 %v94, %v397
    %v403 = vsub.f32 %v99, %v397
    %v404 = vsub.f32 %v104, %v397
    %v405 = vsub.f32 %v109, %v397
    %v406 = vsub.f32 %v114, %v397
    %v407 = vsub.f32 %v119, %v397
    %v408 = vsub.f32 %v124, %v397
    %v409 = vsub.f32 %v129, %v397
    %v410 = vsub.f32 %v134, %v397
    %v411 = vsub.f32 %v139, %v397
    %v412 = vsub.f32 %v144, %v397
    %v413 = vsub.f32 %v149, %v397
    %v414 = vsub.f32 %v154, %v397
    %v415 = vsub.f32 %v159, %v397
    %v416 = vsub.f32 %v164, %v397
    %v417 = vsub.f32 %v169, %v397
    %v418 = vsub.f32 %v174, %v397
    %v419 = vsub.f32 %v179, %v397
    %v420 = vsub.f32 %v184, %v397
    %v421 = vsub.f32 %v189, %v397
    %v422 = vsub.f32 %v194, %v397
    %v423 = vsub.f32 %v199, %v397
    %v424 = vsub.f32 %v204, %v397
    %v425 = vsub.f32 %v209, %v397
    %v426 = vsub.f32 %v214, %v397
    %v427 = vsub.f32 %v219, %v397
    %v428 = vsub.f32 %v224, %v397
    %v429 = vsub.f32 %v229, %v397
    %v430 = vsub.f32 %v234, %v397
    %v431 = vsub.f32 %v239, %v397
    %v432 = vsub.f32 %v244, %v397
    %v433 = vsub.f32 %v249, %v397
    %v434 = vsub.f32 %v254, %v397
    %v435 = vsub.f32 %v259, %v397
    %v436 = vsub.f32 %v264, %v397
    %v437 = vsub.f32 %v269, %v397
    %v438 = vsub.f32 %v274, %v397
    %v439 = vsub.f32 %v279, %v397
    %v440 = vsub.f32 %v284, %v397
    %v441 = vsub.f32 %v289, %v397
    %v442 = vsub.f32 %v294, %v397
    %v443 = vsub.f32 %v299, %v397
    %v444 = vsub.f32 %v304, %v397
    %v445 = vsub.f32 %v309, %v397
    %v446 = vsub.f32 %v314, %v397
    %v447 = vsub.f32 %v319, %v397
    %v448 = vsub.f32 %v324, %v397
    %v449 = vsub.f32 %v329, %v397
    %v450 = vsub.f32 %v334, %v397
    %v451 = vsub.f32 %v339, %v397
    %v452 = vsub.f32 %v344, %v397
    %v453 = vsub.f32 %v349, %v397
    %v454 = vsub.f32 %v354, %v397
    %v455 = vsub.f32 %v359, %v397
    %v456 = vsub.f32 %v364, %v397
    %v457 = vsub.f32 %v369, %v397
    %v458 = vsub.f32 %v374, %v397
    %v459 = vsub.f32 %v379, %v397
    %v460 = vsub.f32 %v384, %v397
    %v461 = vsub.f32 %v389, %v397
    %v462 = vsub.f32 %v394, %v397
    %v463 = vmul.f32 %v399, -8.0
    %v464 = vmul.f32 %v400, -8.0
    %v465 = vmul.f32 %v401, -8.0
    %v466 = vmul.f32 %v402, -8.0
    %v467 = vmul.f32 %v403, -8.0
    %v468 = vmul.f32 %v404, -8.0
    %v469 = vmul.f32 %v405, -8.0
    %v470 = vmul.f32 %v406, -8.0
    %v471 = vmul.f32 %v407, -8.0
    %v472 = vmul.f32 %v408, -8.0
    %v473 = vmul.f32 %v409, -8.0
    %v474 = vmul.f32 %v410, -8.0
    %v475 = vmul.f32 %v411, -8.0
    %v476 = vmul.f32 %v412, -8.0
    %v477 = vmul.f32 %v413, -8.0
    %v478 = vmul.f32 %v414, -8.0
    %v479 = vmul.f32 %v415, -8.0
    %v480 = vmul.f32 %v416, -8.0
    %v481 = vmul.f32 %v417, -8.0
    %v482 = vmul.f32 %v418, -8.0
    %v483 = vmul.f32 %v419, -8.0
    %v484 = vmul.f32 %v420, -8.0
    %v485 = vmul.f32 %v421, -8.0
    %v486 = vmul.f32 %v422, -8.0
    %v487 = vmul.f32 %v423, -8.0
    %v488 = vmul.f32 %v424, -8.0
    %v489 = vmul.f32 %v425, -8.0
    %v490 = vmul.f32 %v426, -8.0
    %v491 = vmul.f32 %v427, -8.0
    %v492 = vmul.f32 %v428, -8.0
    %v493 = vmul.f32 %v429, -8.0
    %v494 = vmul.f32 %v430, -8.0
    %v495 = vmul.f32 %v431, -8.0
    %v496 = vmul.f32 %v432, -8.0
    %v497 = vmul.f32 %v433, -8.0
    %v498 = vmul.f32 %v434, -8.0
    %v499 = vmul.f32 %v435, -8.0
    %v500 = vmul.f32 %v436, -8.0
    %v501 = vmul.f32 %v437, -8.0
    %v502 = vmul.f32 %v438, -8.0
    %v503 = vmul.f32 %v439, -8.0
    %v504 = vmul.f32 %v440, -8.0
    %v505 = vmul.f32 %v441, -8.0
    %v506 = vmul.f32 %v442, -8.0
    %v507 = vmul.f32 %v443, -8.0
    %v508 = vmul.f32 %v444, -8.0
    %v509 = vmul.f32 %v445, -8.0
    %v510 = vmul.f32 %v446, -8.0
    %v511 = vmul.f32 %v447, -8.0
    %v512 = vmul.f32 %v448, -8.0
    %v513 = vmul.f32 %v449, -8.0
    %v514 = vmul.f32 %v450, -8.0
    %v515 = vmul.f32 %v451, -8.0
    %v516 = vmul.f32 %v452, -8.0
    %v517 = vmul.f32 %v453, -8.0
    %v518 = vmul.f32 %v454, -8.0
    %v519 = vmul.f32 %v455, -8.0
    %v520 = vmul.f32 %v456, -8.0
    %v521 = vmul.f32 %v457, -8.0
    %v522 = vmul.f32 %v458, -8.0
    %v523 = vmul.f32 %v459, -8.0
    %v524 = vmul.f32 %v460, -8.0
    %v525 = vmul.f32 %v461, -8.0
    %v526 = vmul.f32 %v462, -8.0
    %v527 = vmul.f32 %v463, %v399
    %v528 = vmul.f32 %v464, %v400
    %v529 = vmul.f32 %v465, %v401
    %v530 = vmul.f32 %v466, %v402
    %v531 = vmul.f32 %v467, %v403
    %v532 = vmul.f32 %v468, %v404
    %v533 = vmul.f32 %v469, %v405
    %v534 = vmul.f32 %v470, %v406
    %v535 = vmul.f32 %v471, %v407
    %v536 = vmul.f32 %v472, %v408
    %v537 = vmul.f32 %v473, %v409
    %v538 = vmul.f32 %v474, %v410
    %v539 = vmul.f32 %v475, %v411
    %v540 = vmul.f32 %v476, %v412
    %v541 = vmul.f32 %v477, %v413
    %v542 = vmul.f32 %v478, %v414
    %v543 = vmul.f32 %v479, %v415
    %v544 = vmul.f32 %v480, %v416
    %v545 = vmul.f32 %v481, %v417
    %v546 = vmul.f32 %v482, %v418
    %v547 = vmul.f32 %v483, %v419
    %v548 = vmul.f32 %v484, %v420
    %v549 = vmul.f32 %v485, %v421
    %v550 = vmul.f32 %v486, %v422
    %v551 = vmul.f32 %v487, %v423
    %v552 = vmul.f32 %v488, %v424
    %v553 = vmul.f32 %v489, %v425
    %v554 = vmul.f32 %v490, %v426
    %v555 = vmul.f32 %v491, %v427
    %v556 = vmul.f32 %v492, %v428
    %v557 = vmul.f32 %v493, %v429
    %v558 = vmul.f32 %v494, %v430
    %v559 = vmul.f32 %v495, %v431
    %v560 = vmul.f32 %v496, %v432
    %v561 = vmul.f32 %v497, %v433
    %v562 = vmul.f32 %v498, %v434
    %v563 = vmul.f32 %v499, %v435
    %v564 = vmul.f32 %v500, %v436
    %v565 = vmul.f32 %v501, %v437
    %v566 = vmul.f32 %v502, %v438
    %v567 = vmul.f32 %v503, %v439
    %v568 = vmul.f32 %v504, %v440
    %v569 = vmul.f32 %v505, %v441
    %v570 = vmul.f32 %v506, %v442
    %v571 = vmul.f32 %v507, %v443
    %v572 = vmul.f32 %v508, %v444
    %v573 = vmul.f32 %v509, %v445
    %v574 = vmul.f32 %v510, %v446
    %v575 = vmul.f32 %v511, %v447
    %v576 = vmul.f32 %v512, %v448
    %v577 = vmul.f32 %v513, %v449
    %v578 = vmul.f32 %v514, %v450
    %v579 = vmul.f32 %v515, %v451
    %v580 = vmul.f32 %v516, %v452
    %v581 = vmul.f32 %v517, %v453
    %v582 = vmul.f32 %v518, %v454
    %v583 = vmul.f32 %v519, %v455
    %v584 = vmul.f32 %v520, %v456
    %v585 = vmul.f32 %v521, %v457
    %v586 = vmul.f32 %v522, %v458
    %v587 = vmul.f32 %v523, %v459
    %v588 = vmul.f32 %v524, %v460
    %v589 = vmul.f32 %v525, %v461
    %v590 = vmul.f32 %v526, %v462
    %v591 = vmul.f32 %v527, 1.442695
    %v592 = vpow.pop %v591
    %v593 = vmul.f32 %v528, 1.442695
    %v594 = vpow.pop %v593
    %v595 = vmul.f32 %v529, 1.442695
    %v596 = vpow.pop %v595
    %v597 = vmul.f32 %v530, 1.442695
    %v598 = vpow.pop %v597
    %v599 = vmul.f32 %v531, 1.442695
    %v600 = vpow.pop %v599
    %v601 = vmul.f32 %v532, 1.442695
    %v602 = vpow.pop %v601
    %v603 = vmul.f32 %v533, 1.442695
    %v604 = vpow.pop %v603
    %v605 = vmul.f32 %v534, 1.442695
    %v606 = vpow.pop %v605
    %v607 = vmul.f32 %v535, 1.442695
    %v608 = vpow.pop %v607
    %v609 = vmul.f32 %v536, 1.442695
    %v610 = vpow.pop %v609
    %v611 = vmul.f32 %v537, 1.442695
    %v612 = vpow.pop %v611
    %v613 = vmul.f32 %v538, 1.442695
    %v614 = vpow.pop %v613
    %v615 = vmul.f32 %v539, 1.442695
    %v616 = vpow.pop %v615
    %v617 = vmul.f32 %v540, 1.442695
    %v618 = vpow.pop %v617
    %v619 = vmul.f32 %v541, 1.442695
    %v620 = vpow.pop %v619
    %v621 = vmul.f32 %v542, 1.442695
    %v622 = vpow.pop %v621
    %v623 = vmul.f32 %v543, 1.442695
    %v624 = vpow.pop %v623
    %v625 = vmul.f32 %v544, 1.442695
    %v626 = vpow.pop %v625
    %v627 = vmul.f32 %v545, 1.442695
    %v628 = vpow.pop %v627
    %v629 = vmul.f32 %v546, 1.442695
    %v630 = vpow.pop %v629
    %v631 = vmul.f32 %v547, 1.442695
    %v632 = vpow.pop %v631
    %v633 = vmul.f32 %v548, 1.442695
    %v634 = vpow.pop %v633
    %v635 = vmul.f32 %v549, 1.442695
    %v636 = vpow.pop %v635
    %v637 = vmul.f32 %v550, 1.442695
    %v638 = vpow.pop %v637
    %v639 = vmul.f32 %v551, 1.442695
    %v640 = vpow.pop %v639
    %v641 = vmul.f32 %v552, 1.442695
    %v642 = vpow.pop %v641
    %v643 = vmul.f32 %v553, 1.442695
    %v644 = vpow.pop %v643
    %v645 = vmul.f32 %v554, 1.442695
    %v646 = vpow.pop %v645
    %v647 = vmul.f32 %v555, 1.442695
    %v648 = vpow.pop %v647
    %v649 = vmul.f32 %v556, 1.442695
    %v650 = vpow.pop %v649
    %v651 = vmul.f32 %v557, 1.442695
    %v652 = vpow.pop %v651
    %v653 = vmul.f32 %v558, 1.442695
    %v654 = vpow.pop %v653
    %v655 = vmul.f32 %v559, 1.442695
    %v656 = vpow.pop %v655
    %v657 = vmul.f32 %v560, 1.442695
    %v658 = vpow.pop %v657
    %v659 = vmul.f32 %v561, 1.442695
    %v660 = vpow.pop %v659
    %v661 = vmul.f32 %v562, 1.442695
    %v662 = vpow.pop %v661
    %v663 = vmul.f32 %v563, 1.442695
    %v664 = vpow.pop %v663
    %v665 = vmul.f32 %v564, 1.442695
    %v666 = vpow.pop %v665
    %v667 = vmul.f32 %v565, 1.442695
    %v668 = vpow.pop %v667
    %v669 = vmul.f32 %v566, 1.442695
    %v670 = vpow.pop %v669
    %v671 = vmul.f32 %v567, 1.442695
    %v672 = vpow.pop %v671
    %v673 = vmul.f32 %v568, 1.442695
    %v674 = vpow.pop %v673
    %v675 = vmul.f32 %v569, 1.442695
    %v676 = vpow.pop %v675
    %v677 = vmul.f32 %v570, 1.442695
    %v678 = vpow.pop %v677
    %v679 = vmul.f32 %v571, 1.442695
    %v680 = vpow.pop %v679
    %v681 = vmul.f32 %v572, 1.442695
    %v682 = vpow.pop %v681
    %v683 = vmul.f32 %v573, 1.442695
    %v684 = vpow.pop %v683
    %v685 = vmul.f32 %v574, 1.442695
    %v686 = vpow.pop %v685
    %v687 = vmul.f32 %v575, 1.442695
    %v688 = vpow.pop %v687
    %v689 = vmul.f32 %v576, 1.442695
    %v690 = vpow.pop %v689
    %v691 = vmul.f32 %v577, 1.442695
    %v692 = vpow.pop %v691
    %v693 = vmul.f32 %v578, 1.442695
    %v694 = vpow.pop %v693
    %v695 = vmul.f32 %v579, 1.442695
    %v696 = vpow.pop %v695
    %v697 = vmul.f32 %v580, 1.442695
    %v698 = vpow.pop %v697
    %v699 = vmul.f32 %v581, 1.442695
    %v700 = vpow.pop %v699
    %v701 = vmul.f32 %v582, 1.442695
    %v702 = vpow.pop %v701
    %v703 = vmul.f32 %v583, 1.442695
    %v704 = vpow.pop %v703
    %v705 = vmul.f32 %v584, 1.442695
    %v706 = vpow.pop %v705
    %v707 = vmul.f32 %v585, 1.442695
    %v708 = vpow.pop %v707
    %v709 = vmul.f32 %v586, 1.442695
    %v710 = vpow.pop %v709
    %v711 = vmul.f32 %v587, 1.442695
    %v712 = vpow.pop %v711
    %v713 = vmul.f32 %v588, 1.442695
    %v714 = vpow.pop %v713
    %v715 = vmul.f32 %v589, 1.442695
    %v716 = vpow.pop %v715
    %v717 = vmul.f32 %v590, 1.442695
    %v718 = vpow.pop %v717
    %vm719 = vcmask 408576
    %720 = vst.msk [vmem:[#allocation2] sm:$0xff] %vm719, %v592
    %721 = vst.msk [vmem:[#allocation2 + $0x8] sm:$0xff] %vm719, %v594
    %722 = vst.msk [vmem:[#allocation2 + $0x10] sm:$0xff] %vm719, %v596
    %723 = vst.msk [vmem:[#allocation2 + $0x18] sm:$0xff] %vm719, %v598
    %724 = vst.msk [vmem:[#allocation2 + $0x20] sm:$0xff] %vm719, %v600
    %725 = vst.msk [vmem:[#allocation2 + $0x28] sm:$0xff] %vm719, %v602
    %726 = vst.msk [vmem:[#allocation2 + $0x30] sm:$0xff] %vm719, %v604
    %727 = vst.msk [vmem:[#allocation2 + $0x38] sm:$0xff] %vm719, %v606
    %728 = vst.msk [vmem:[#allocation2 + $0x40] sm:$0xff] %vm719, %v608
    %729 = vst.msk [vmem:[#allocation2 + $0x48] sm:$0xff] %vm719, %v610
    %730 = vst.msk [vmem:[#allocation2 + $0x50] sm:$0xff] %vm719, %v612
    %731 = vst.msk [vmem:[#allocation2 + $0x58] sm:$0xff] %vm719, %v614
    %732 = vst.msk [vmem:[#allocation2 + $0x60] sm:$0xff] %vm719, %v616
    %733 = vst.msk [vmem:[#allocation2 + $0x68] sm:$0xff] %vm719, %v618
    %734 = vst.msk [vmem:[#allocation2 + $0x70] sm:$0xff] %vm719, %v620
    %735 = vst.msk [vmem:[#allocation2 + $0x78] sm:$0xff] %vm719, %v622
    %736 = vst.msk [vmem:[#allocation2 + $0x80] sm:$0xff] %vm719, %v624
    %737 = vst.msk [vmem:[#allocation2 + $0x88] sm:$0xff] %vm719, %v626
    %738 = vst.msk [vmem:[#allocation2 + $0x90] sm:$0xff] %vm719, %v628
    %739 = vst.msk [vmem:[#allocation2 + $0x98] sm:$0xff] %vm719, %v630
    %740 = vst.msk [vmem:[#allocation2 + $0xa0] sm:$0xff] %vm719, %v632
    %741 = vst.msk [vmem:[#allocation2 + $0xa8] sm:$0xff] %vm719, %v634
    %742 = vst.msk [vmem:[#allocation2 + $0xb0] sm:$0xff] %vm719, %v636
    %743 = vst.msk [vmem:[#allocation2 + $0xb8] sm:$0xff] %vm719, %v638
    %744 = vst.msk [vmem:[#allocation2 + $0xc0] sm:$0xff] %vm719, %v640
    %745 = vst.msk [vmem:[#allocation2 + $0xc8] sm:$0xff] %vm719, %v642
    %746 = vst.msk [vmem:[#allocation2 + $0xd0] sm:$0xff] %vm719, %v644
    %747 = vst.msk [vmem:[#allocation2 + $0xd8] sm:$0xff] %vm719, %v646
    %748 = vst.msk [vmem:[#allocation2 + $0xe0] sm:$0xff] %vm719, %v648
    %749 = vst.msk [vmem:[#allocation2 + $0xe8] sm:$0xff] %vm719, %v650
    %750 = vst.msk [vmem:[#allocation2 + $0xf0] sm:$0xff] %vm719, %v652
    %751 = vst.msk [vmem:[#allocation2 + $0xf8] sm:$0xff] %vm719, %v654
    %752 = vst.msk [vmem:[#allocation2 + $0x100] sm:$0xff] %vm719, %v656
    %753 = vst.msk [vmem:[#allocation2 + $0x108] sm:$0xff] %vm719, %v658
    %754 = vst.msk [vmem:[#allocation2 + $0x110] sm:$0xff] %vm719, %v660
    %755 = vst.msk [vmem:[#allocation2 + $0x118] sm:$0xff] %vm719, %v662
    %756 = vst.msk [vmem:[#allocation2 + $0x120] sm:$0xff] %vm719, %v664
    %757 = vst.msk [vmem:[#allocation2 + $0x128] sm:$0xff] %vm719, %v666
    %758 = vst.msk [vmem:[#allocation2 + $0x130] sm:$0xff] %vm719, %v668
    %759 = vst.msk [vmem:[#allocation2 + $0x138] sm:$0xff] %vm719, %v670
    %760 = vst.msk [vmem:[#allocation2 + $0x140] sm:$0xff] %vm719, %v672
    %761 = vst.msk [vmem:[#allocation2 + $0x148] sm:$0xff] %vm719, %v674
    %762 = vst.msk [vmem:[#allocation2 + $0x150] sm:$0xff] %vm719, %v676
    %763 = vst.msk [vmem:[#allocation2 + $0x158] sm:$0xff] %vm719, %v678
    %764 = vst.msk [vmem:[#allocation2 + $0x160] sm:$0xff] %vm719, %v680
    %765 = vst.msk [vmem:[#allocation2 + $0x168] sm:$0xff] %vm719, %v682
    %766 = vst.msk [vmem:[#allocation2 + $0x170] sm:$0xff] %vm719, %v684
    %767 = vst.msk [vmem:[#allocation2 + $0x178] sm:$0xff] %vm719, %v686
    %768 = vst.msk [vmem:[#allocation2 + $0x180] sm:$0xff] %vm719, %v688
    %769 = vst.msk [vmem:[#allocation2 + $0x188] sm:$0xff] %vm719, %v690
    %770 = vst.msk [vmem:[#allocation2 + $0x190] sm:$0xff] %vm719, %v692
    %771 = vst.msk [vmem:[#allocation2 + $0x198] sm:$0xff] %vm719, %v694
    %772 = vst.msk [vmem:[#allocation2 + $0x1a0] sm:$0xff] %vm719, %v696
    %773 = vst.msk [vmem:[#allocation2 + $0x1a8] sm:$0xff] %vm719, %v698
    %774 = vst.msk [vmem:[#allocation2 + $0x1b0] sm:$0xff] %vm719, %v700
    %775 = vst.msk [vmem:[#allocation2 + $0x1b8] sm:$0xff] %vm719, %v702
    %776 = vst.msk [vmem:[#allocation2 + $0x1c0] sm:$0xff] %vm719, %v704
    %777 = vst.msk [vmem:[#allocation2 + $0x1c8] sm:$0xff] %vm719, %v706
    %778 = vst.msk [vmem:[#allocation2 + $0x1d0] sm:$0xff] %vm719, %v708
    %779 = vst.msk [vmem:[#allocation2 + $0x1d8] sm:$0xff] %vm719, %v710
    %780 = vst.msk [vmem:[#allocation2 + $0x1e0] sm:$0xff] %vm719, %v712
    %781 = vst.msk [vmem:[#allocation2 + $0x1e8] sm:$0xff] %vm719, %v714
    %782 = vst.msk [vmem:[#allocation2 + $0x1f0] sm:$0xff] %vm719, %v716
    %783 = vst.msk [vmem:[#allocation2 + $0x1f8] sm:$0xff] %vm719, %v718
    // Predicated region
    $region10: #{tpu_custom_call.1} parent=1 // pred_check
      _
    $region11: #{tpu_custom_call.1} parent=1 // pred_check_branch
      %785 = sbr.rel (0) target = $region13
    $region12: #{tpu_custom_call.1} parent=1 // pred_region
      // Predicated region
      $region14: #{tpu_custom_call.1} parent=12 // pred_check
        _
      $region15: #{tpu_custom_call.1} parent=12 // pred_check_branch
        %787 = sbr.rel (0) target = $region17
      $region16: #{tpu_custom_call.1} parent=12 // pred_region
        // Predicated region
        $region18: #{tpu_custom_call.1} parent=16 // pred_check
          _
        $region19: #{tpu_custom_call.1} parent=16 // pred_check_branch
          %789 = sbr.rel (0) target = $region21
        $region20: #{tpu_custom_call.1} parent=16 // pred_region
          // Predicated region
          $region33: #{tpu_custom_call.1} parent=20 // pred_check
            _
          $region34: #{tpu_custom_call.1} parent=20 // pred_check_branch
            %879 = sbr.rel (0) target = $region36
          $region35: #{tpu_custom_call.1} parent=20 // pred_region
            loop: start=0, step=1, limit=1
            $region37: #{tpu_custom_call.1} parent=35 // loop_pre_header
              _
            $region38: #{tpu_custom_call.1} parent=35 // loop_header
              %s881 = sphi 0, %s885
              %p882 = scmp.ge.s32.totalorder %s881, 1
              %s886 = sphi [#allocation2], [#allocation2]
              %s887 = sphi %s2, %s2
            $region39: #{tpu_custom_call.1} parent=35 // loop_header_branch
              %884 = sbr.rel (%p882) target = $region43
            $region40: #{tpu_custom_call.1} parent=35 // loop_body
              %v888 = vld [vmem:[%s886] sm:$0xff]
              %889 = vst [vmem:[%s887] sm:$0xff] %v888
              %v890 = vld [vmem:[%s886 + $0x8] sm:$0xff]
              %891 = vst [vmem:[%s887 + $0x8] sm:$0xff] %v890
              %v892 = vld [vmem:[%s886 + $0x10] sm:$0xff]
              %893 = vst [vmem:[%s887 + $0x10] sm:$0xff] %v892
              %v894 = vld [vmem:[%s886 + $0x18] sm:$0xff]
              %895 = vst [vmem:[%s887 + $0x18] sm:$0xff] %v894
              %v896 = vld [vmem:[%s886 + $0x20] sm:$0xff]
              %897 = vst [vmem:[%s887 + $0x20] sm:$0xff] %v896
              %v898 = vld [vmem:[%s886 + $0x28] sm:$0xff]
              %899 = vst [vmem:[%s887 + $0x28] sm:$0xff] %v898
              %v900 = vld [vmem:[%s886 + $0x30] sm:$0xff]
              %901 = vst [vmem:[%s887 + $0x30] sm:$0xff] %v900
              %v902 = vld [vmem:[%s886 + $0x38] sm:$0xff]
              %903 = vst [vmem:[%s887 + $0x38] sm:$0xff] %v902
              %v904 = vld [vmem:[%s886 + $0x40] sm:$0xff]
              %905 = vst [vmem:[%s887 + $0x40] sm:$0xff] %v904
              %v906 = vld [vmem:[%s886 + $0x48] sm:$0xff]
              %907 = vst [vmem:[%s887 + $0x48] sm:$0xff] %v906
              %v908 = vld [vmem:[%s886 + $0x50] sm:$0xff]
              %909 = vst [vmem:[%s887 + $0x50] sm:$0xff] %v908
              %v910 = vld [vmem:[%s886 + $0x58] sm:$0xff]
              %911 = vst [vmem:[%s887 + $0x58] sm:$0xff] %v910
              %v912 = vld [vmem:[%s886 + $0x60] sm:$0xff]
              %913 = vst [vmem:[%s887 + $0x60] sm:$0xff] %v912
              %v914 = vld [vmem:[%s886 + $0x68] sm:$0xff]
              %915 = vst [vmem:[%s887 + $0x68] sm:$0xff] %v914
              %v916 = vld [vmem:[%s886 + $0x70] sm:$0xff]
              %917 = vst [vmem:[%s887 + $0x70] sm:$0xff] %v916
              %v918 = vld [vmem:[%s886 + $0x78] sm:$0xff]
              %919 = vst [vmem:[%s887 + $0x78] sm:$0xff] %v918
              %v920 = vld [vmem:[%s886 + $0x80] sm:$0xff]
              %921 = vst [vmem:[%s887 + $0x80] sm:$0xff] %v920
              %v922 = vld [vmem:[%s886 + $0x88] sm:$0xff]
              %923 = vst [vmem:[%s887 + $0x88] sm:$0xff] %v922
              %v924 = vld [vmem:[%s886 + $0x90] sm:$0xff]
              %925 = vst [vmem:[%s887 + $0x90] sm:$0xff] %v924
              %v926 = vld [vmem:[%s886 + $0x98] sm:$0xff]
              %927 = vst [vmem:[%s887 + $0x98] sm:$0xff] %v926
              %v928 = vld [vmem:[%s886 + $0xa0] sm:$0xff]
              %929 = vst [vmem:[%s887 + $0xa0] sm:$0xff] %v928
              %v930 = vld [vmem:[%s886 + $0xa8] sm:$0xff]
              %931 = vst [vmem:[%s887 + $0xa8] sm:$0xff] %v930
              %v932 = vld [vmem:[%s886 + $0xb0] sm:$0xff]
              %933 = vst [vmem:[%s887 + $0xb0] sm:$0xff] %v932
              %v934 = vld [vmem:[%s886 + $0xb8] sm:$0xff]
              %935 = vst [vmem:[%s887 + $0xb8] sm:$0xff] %v934
              %v936 = vld [vmem:[%s886 + $0xc0] sm:$0xff]
              %937 = vst [vmem:[%s887 + $0xc0] sm:$0xff] %v936
              %v938 = vld [vmem:[%s886 + $0xc8] sm:$0xff]
              %939 = vst [vmem:[%s887 + $0xc8] sm:$0xff] %v938
              %v940 = vld [vmem:[%s886 + $0xd0] sm:$0xff]
              %941 = vst [vmem:[%s887 + $0xd0] sm:$0xff] %v940
              %v942 = vld [vmem:[%s886 + $0xd8] sm:$0xff]
              %943 = vst [vmem:[%s887 + $0xd8] sm:$0xff] %v942
              %v944 = vld [vmem:[%s886 + $0xe0] sm:$0xff]
              %945 = vst [vmem:[%s887 + $0xe0] sm:$0xff] %v944
              %v946 = vld [vmem:[%s886 + $0xe8] sm:$0xff]
              %947 = vst [vmem:[%s887 + $0xe8] sm:$0xff] %v946
              %v948 = vld [vmem:[%s886 + $0xf0] sm:$0xff]
              %949 = vst [vmem:[%s887 + $0xf0] sm:$0xff] %v948
              %v950 = vld [vmem:[%s886 + $0xf8] sm:$0xff]
              %951 = vst [vmem:[%s887 + $0xf8] sm:$0xff] %v950
              %v952 = vld [vmem:[%s886 + $0x100] sm:$0xff]
              %953 = vst [vmem:[%s887 + $0x100] sm:$0xff] %v952
              %v954 = vld [vmem:[%s886 + $0x108] sm:$0xff]
              %955 = vst [vmem:[%s887 + $0x108] sm:$0xff] %v954
              %v956 = vld [vmem:[%s886 + $0x110] sm:$0xff]
              %957 = vst [vmem:[%s887 + $0x110] sm:$0xff] %v956
              %v958 = vld [vmem:[%s886 + $0x118] sm:$0xff]
              %959 = vst [vmem:[%s887 + $0x118] sm:$0xff] %v958
              %v960 = vld [vmem:[%s886 + $0x120] sm:$0xff]
              %961 = vst [vmem:[%s887 + $0x120] sm:$0xff] %v960
              %v962 = vld [vmem:[%s886 + $0x128] sm:$0xff]
              %963 = vst [vmem:[%s887 + $0x128] sm:$0xff] %v962
            $region41: #{tpu_custom_call.1} parent=35 // loop_footer
              %s885 = sadd.s32 1, %s881
            $region42: #{tpu_custom_call.1} parent=35 // loop_footer_branch
              %880 = sbr.rel target = $region38
            $region43: #{tpu_custom_call.1} parent=35 // loop_exit
              _
          $region36: #{tpu_custom_call.1} parent=20 // pred_fallthru
            _
          // Predicated region
          $region44: #{tpu_custom_call.1} parent=20 // pred_check
            _
          $region45: #{tpu_custom_call.1} parent=20 // pred_check_branch
            %965 = sbr.rel target = $region47
          $region46: #{tpu_custom_call.1} parent=20 // pred_region
            _
          $region47: #{tpu_custom_call.1} parent=20 // pred_fallthru
            _
        $region21: #{tpu_custom_call.1} parent=16 // pred_fallthru
          _
        // Predicated region
        $region22: #{tpu_custom_call.1} parent=16 // pred_check
          _
        $region23: #{tpu_custom_call.1} parent=16 // pred_check_branch
          %791 = sbr.rel target = $region25
        $region24: #{tpu_custom_call.1} parent=16 // pred_region
          %s793 = ssub.s32 256, 1
          loop: start=0, step=1, limit=1
          $region26: #{tpu_custom_call.1} parent=24 // loop_pre_header
            _
          $region27: #{tpu_custom_call.1} parent=24 // loop_header
            %s795 = sphi 0, %s799
            %p796 = scmp.ge.s32.totalorder %s795, 1
            %s800 = sphi [#allocation2], [#allocation2]
            %s801 = sphi %s2, %s2
          $region28: #{tpu_custom_call.1} parent=24 // loop_header_branch
            %798 = sbr.rel (%p796) target = $region32
          $region29: #{tpu_custom_call.1} parent=24 // loop_body
            %v802 = vld [vmem:[%s800] sm:%s793]
            %803 = vst [vmem:[%s801] sm:%s793] %v802
            %v804 = vld [vmem:[%s800 + $0x8] sm:%s793]
            %805 = vst [vmem:[%s801 + $0x8] sm:%s793] %v804
            %v806 = vld [vmem:[%s800 + $0x10] sm:%s793]
            %807 = vst [vmem:[%s801 + $0x10] sm:%s793] %v806
            %v808 = vld [vmem:[%s800 + $0x18] sm:%s793]
            %809 = vst [vmem:[%s801 + $0x18] sm:%s793] %v808
            %v810 = vld [vmem:[%s800 + $0x20] sm:%s793]
            %811 = vst [vmem:[%s801 + $0x20] sm:%s793] %v810
            %v812 = vld [vmem:[%s800 + $0x28] sm:%s793]
            %813 = vst [vmem:[%s801 + $0x28] sm:%s793] %v812
            %v814 = vld [vmem:[%s800 + $0x30] sm:%s793]
            %815 = vst [vmem:[%s801 + $0x30] sm:%s793] %v814
            %v816 = vld [vmem:[%s800 + $0x38] sm:%s793]
            %817 = vst [vmem:[%s801 + $0x38] sm:%s793] %v816
            %v818 = vld [vmem:[%s800 + $0x40] sm:%s793]
            %819 = vst [vmem:[%s801 + $0x40] sm:%s793] %v818
            %v820 = vld [vmem:[%s800 + $0x48] sm:%s793]
            %821 = vst [vmem:[%s801 + $0x48] sm:%s793] %v820
            %v822 = vld [vmem:[%s800 + $0x50] sm:%s793]
            %823 = vst [vmem:[%s801 + $0x50] sm:%s793] %v822
            %v824 = vld [vmem:[%s800 + $0x58] sm:%s793]
            %825 = vst [vmem:[%s801 + $0x58] sm:%s793] %v824
            %v826 = vld [vmem:[%s800 + $0x60] sm:%s793]
            %827 = vst [vmem:[%s801 + $0x60] sm:%s793] %v826
            %v828 = vld [vmem:[%s800 + $0x68] sm:%s793]
            %829 = vst [vmem:[%s801 + $0x68] sm:%s793] %v828
            %v830 = vld [vmem:[%s800 + $0x70] sm:%s793]
            %831 = vst [vmem:[%s801 + $0x70] sm:%s793] %v830
            %v832 = vld [vmem:[%s800 + $0x78] sm:%s793]
            %833 = vst [vmem:[%s801 + $0x78] sm:%s793] %v832
            %v834 = vld [vmem:[%s800 + $0x80] sm:%s793]
            %835 = vst [vmem:[%s801 + $0x80] sm:%s793] %v834
            %v836 = vld [vmem:[%s800 + $0x88] sm:%s793]
            %837 = vst [vmem:[%s801 + $0x88] sm:%s793] %v836
            %v838 = vld [vmem:[%s800 + $0x90] sm:%s793]
            %839 = vst [vmem:[%s801 + $0x90] sm:%s793] %v838
            %v840 = vld [vmem:[%s800 + $0x98] sm:%s793]
            %841 = vst [vmem:[%s801 + $0x98] sm:%s793] %v840
            %v842 = vld [vmem:[%s800 + $0xa0] sm:%s793]
            %843 = vst [vmem:[%s801 + $0xa0] sm:%s793] %v842
            %v844 = vld [vmem:[%s800 + $0xa8] sm:%s793]
            %845 = vst [vmem:[%s801 + $0xa8] sm:%s793] %v844
            %v846 = vld [vmem:[%s800 + $0xb0] sm:%s793]
            %847 = vst [vmem:[%s801 + $0xb0] sm:%s793] %v846
            %v848 = vld [vmem:[%s800 + $0xb8] sm:%s793]
            %849 = vst [vmem:[%s801 + $0xb8] sm:%s793] %v848
            %v850 = vld [vmem:[%s800 + $0xc0] sm:%s793]
            %851 = vst [vmem:[%s801 + $0xc0] sm:%s793] %v850
            %v852 = vld [vmem:[%s800 + $0xc8] sm:%s793]
            %853 = vst [vmem:[%s801 + $0xc8] sm:%s793] %v852
            %v854 = vld [vmem:[%s800 + $0xd0] sm:%s793]
            %855 = vst [vmem:[%s801 + $0xd0] sm:%s793] %v854
            %v856 = vld [vmem:[%s800 + $0xd8] sm:%s793]
            %857 = vst [vmem:[%s801 + $0xd8] sm:%s793] %v856
            %v858 = vld [vmem:[%s800 + $0xe0] sm:%s793]
            %859 = vst [vmem:[%s801 + $0xe0] sm:%s793] %v858
            %v860 = vld [vmem:[%s800 + $0xe8] sm:%s793]
            %861 = vst [vmem:[%s801 + $0xe8] sm:%s793] %v860
            %v862 = vld [vmem:[%s800 + $0xf0] sm:%s793]
            %863 = vst [vmem:[%s801 + $0xf0] sm:%s793] %v862
            %v864 = vld [vmem:[%s800 + $0xf8] sm:%s793]
            %865 = vst [vmem:[%s801 + $0xf8] sm:%s793] %v864
            %v866 = vld [vmem:[%s800 + $0x100] sm:%s793]
            %867 = vst [vmem:[%s801 + $0x100] sm:%s793] %v866
            %v868 = vld [vmem:[%s800 + $0x108] sm:%s793]
            %869 = vst [vmem:[%s801 + $0x108] sm:%s793] %v868
            %v870 = vld [vmem:[%s800 + $0x110] sm:%s793]
            %871 = vst [vmem:[%s801 + $0x110] sm:%s793] %v870
            %v872 = vld [vmem:[%s800 + $0x118] sm:%s793]
            %873 = vst [vmem:[%s801 + $0x118] sm:%s793] %v872
            %v874 = vld [vmem:[%s800 + $0x120] sm:%s793]
            %875 = vst [vmem:[%s801 + $0x120] sm:%s793] %v874
            %v876 = vld [vmem:[%s800 + $0x128] sm:%s793]
            %877 = vst [vmem:[%s801 + $0x128] sm:%s793] %v876
          $region30: #{tpu_custom_call.1} parent=24 // loop_footer
            %s799 = sadd.s32 1, %s795
          $region31: #{tpu_custom_call.1} parent=24 // loop_footer_branch
            %794 = sbr.rel target = $region27
          $region32: #{tpu_custom_call.1} parent=24 // loop_exit
            _
        $region25: #{tpu_custom_call.1} parent=16 // pred_fallthru
          _
      $region17: #{tpu_custom_call.1} parent=12 // pred_fallthru
        _
      %966 = vnop
    $region13: #{tpu_custom_call.1} parent=1 // pred_fallthru
      _
    // Predicated region
    $region48: #{tpu_custom_call.1} parent=1 // pred_check
      _
    $region49: #{tpu_custom_call.1} parent=1 // pred_check_branch
      %968 = sbr.rel (0) target = $region51
    $region50: #{tpu_custom_call.1} parent=1 // pred_region
      _
    $region51: #{tpu_custom_call.1} parent=1 // pred_fallthru
      _

</llo_original>
